<compile_context>
chip_gen: v5e
topology: v5e:2x2
jax: 0.10.0
libtpu: 0.0.40
codegen_flags: <defaults>
</compile_context>

<pallas_src>
import functools
import math

import jax
import jax.numpy as jnp
from jax.experimental import pallas as pl
from jax.experimental.pallas import tpu as pltpu


def _cdiv(a, b):
    return -(-a // b)


def _xlogy_scalar(v):
    """xlogy(v, v) for a Python scalar, matching torch semantics (NaN for v<0)."""
    v = float(v)
    if v == 0.0:
        return 0.0
    if v < 0.0:
        return float("nan")  # log of a negative number, as the PyTorch module produces
    return v * math.log(v)


def _vmem_budgets():
    """Returns (per-block VMEM budget, vmem_limit_bytes), sized per generation."""
    try:
        cap = int(getattr(pltpu.get_tpu_info(), "vmem_capacity_bytes", 0))
    except Exception:
        cap = 0
    if cap >= 100 * 2**20:          # v5e / v6e: 128 MiB physical VMEM
        return 40 * 2**20, 56 * 2**20
    # v7x (64 MiB physical) or unknown: stay conservative.
    return 24 * 2**20, 40 * 2**20


def _choose_tile_n(n, c, itemsize, block_budget):
    """Largest sublane-aligned batch tile whose working set fits the budget."""
    sub = 8 * max(1, 4 // itemsize)          # sublane multiple: 8 (f32) / 16 (bf16)
    # VMEM cost per block element: double-buffered input + ~3 f32 temporaries.
    per_elem = 2 * itemsize + 3 * 4
    cap_rows = max(sub, (block_budget // per_elem) // max(c, 1))
    cap_rows = max(sub, (cap_rows // sub) * sub)
    # TODO(synk): for vocab-scale C where even a sub-row block exceeds VMEM,
    # add a C-tiled inner grid axis with an online (running-max) log-softmax.
    if n <= cap_rows:
        return n, sub                        # single block = full dim (always legal)
    return cap_rows, sub


def _label_smoothing_kernel(x_ref, tgt_ref, out_ref, *, smoothing, n_rows):
    p = pl.program_id(0)                     # parallel (core) axis
    j = pl.program_id(1)                     # sequential reduction axis
    inner = pl.num_programs(1)

    @pl.when(j == 0)
    def _init():
        out_ref[...] = jnp.zeros_like(out_ref)

    x = x_ref[...].astype(jnp.float32)       # (tile_n, C), math in f32
    tn, c = x.shape

    fill = smoothing / c - 1.0               # off-target true_dist value (negative!)
    on_val = 1.0 - smoothing                 # on-target true_dist value
    k_row = on_val + (c - 1) * fill          # per-row sum of true_dist (constant)

    # Targets arrive lane-dense as (1, tile_n); one small 32-bit relayout per
    # step produces the (tile_n, 1) column used for the class comparison.
    tgt_col = jnp.transpose(tgt_ref[0], (1, 0))                   # (tile_n, 1) int32

    # Numerically stable log-softmax pieces; the full log-prob matrix is never
    # materialised:  logp = z - lse.
    m = jnp.max(x, axis=1, keepdims=True)                         # (tn, 1)
    z = x - m
    lse = jnp.log(jnp.sum(jnp.exp(z), axis=1, keepdims=True))     # (tn, 1)

    # Fused weighted reduction:
    #   sum_c true_dist * logp = sum_c(w * z) - (sum_c w) * lse,  sum_c w = k_row
    col = jax.lax.broadcasted_iota(jnp.int32, (tn, c), 1)
    w = jnp.where(col == tgt_col, on_val, fill)                   # (tn, C)
    contrib = jnp.sum(w * z, axis=1, keepdims=True) - k_row * lse  # (tn, 1)

    # Mask padded tail rows (grid uses cdiv; the last block may be partial and
    # its out-of-bounds rows contain unspecified data).
    row0 = (p * inner + j) * tn
    rows = row0 + jax.lax.broadcasted_iota(jnp.int32, (tn, 1), 0)
    contrib = jnp.where(rows < n_rows, contrib, 0.0)

    out_ref[...] += jnp.sum(contrib, axis=0, keepdims=True)       # (1, 1) partial


def _smoothed_logprob_sum(x, target, smoothing, tile_n=None):
    """Returns sum over all elements of true_dist * log_softmax(x) (finite part)."""
    n, c = x.shape
    itemsize = jnp.dtype(x.dtype).itemsize
    block_budget, vmem_limit = _vmem_budgets()
    auto_tile, sub = _choose_tile_n(n, c, itemsize, block_budget)

    if tile_n is None:
        tile_n = auto_tile
        num_tiles = _cdiv(n, tile_n)
        # Keep both v7x TensorCores busy: nudge tile_n down (still sublane
        # aligned, never below half the budgeted size) until the tile count is
        # even. Single-core v5e/v6e simply serializes the parallel axis.
        if num_tiles > 1 and num_tiles % 2 == 1:
            t = tile_n - sub
            floor_t = max(sub, tile_n // 2)
            while t >= floor_t:
                if _cdiv(n, t) % 2 == 0:
                    tile_n = t
                    break
                t -= sub
            num_tiles = _cdiv(n, tile_n)
    else:
        tile_n = int(tile_n)
        if tile_n != n:
            assert tile_n % sub == 0, "tile_n must be a multiple of the sublane size"
        num_tiles = _cdiv(n, tile_n)

    num_parallel = 2 if (num_tiles >= 2 and num_tiles % 2 == 0) else 1
    inner = num_tiles // num_parallel

    # Targets: lane-dense (num_tiles, 1, tile_n) so each grid step DMAs a small
    # contiguous row instead of a 128x-lane-padded (tile_n, 1) column.
    tgt_flat = target.astype(jnp.int32).reshape(-1)
    pad = num_tiles * tile_n - n
    if pad:
        tgt_flat = jnp.pad(tgt_flat, (0, pad))
    tgt_arr = tgt_flat.reshape(num_tiles, 1, tile_n)

    kernel = functools.partial(
        _label_smoothing_kernel, smoothing=float(smoothing), n_rows=n)

    cost = pl.CostEstimate(
        flops=7 * n * c,
        transcendentals=n * c,
        bytes_accessed=n * c * itemsize + n * 4 + num_parallel * 4,
    )

    partials = pl.pallas_call(
        kernel,
        out_shape=jax.ShapeDtypeStruct((num_parallel, 1), jnp.float32),
        grid=(num_parallel, inner),
        in_specs=[
            pl.BlockSpec((tile_n, c), lambda p, j: (p * inner + j, 0)),
            pl.BlockSpec((1, 1, tile_n), lambda p, j: (p * inner + j, 0, 0)),
        ],
        out_specs=pl.BlockSpec((1, 1), lambda p, j: (p, 0)),
        compiler_params=pltpu.CompilerParams(
            dimension_semantics=("parallel", "arbitrary"),
            vmem_limit_bytes=int(vmem_limit),
        ),
        cost_estimate=cost,
    )(x, tgt_arr)
    return jnp.sum(partials)


def label_smoothing_loss(x, target, smoothing=0.1, tile_n=None):
    n, c = x.shape
    s = _smoothed_logprob_sum(x, target, smoothing, tile_n=tile_n)
    # Constant sum of xlogy(true_dist, true_dist), hoisted out of the kernel.
    # NaN by construction: the module fills true_dist with (smoothing/C - 1) < 0.
    xlogy_sum = n * ((c - 1) * _xlogy_scalar(smoothing / c - 1.0)
                     + _xlogy_scalar(1.0 - smoothing))
    return (jnp.float32(xlogy_sum) - s) / (n * c)


def _reference(x, target, smoothing=0.1):
    n, c = x.shape
    logp = jax.nn.log_softmax(x.astype(jnp.float32), axis=1)
    fill = smoothing / c - 1.0
    y = jnp.full((n, c), fill, jnp.float32)
    y = y.at[jnp.arange(n), target].set(1.0 - smoothing)
    xlogy = jnp.where(y == 0.0, 0.0, y * jnp.log(y))
    return jnp.mean(xlogy - y * logp), jnp.sum(y * logp)


if __name__ == "__main__":
    key = jax.random.PRNGKey(0)
    kx, kt = jax.random.split(key)
    N, C = 64, 128
    smoothing = 0.1
    x = jax.random.normal(kx, (N, C), dtype=jnp.float32)
    target = jax.random.randint(kt, (N,), 0, C, dtype=jnp.int32)

    ref_loss, ref_s = _reference(x, target, smoothing)

    # Finite part (sum of true_dist * log_softmax): meaningful numeric checks.
    s_auto = _smoothed_logprob_sum(x, target, smoothing)             # single block
    s_tiled = _smoothed_logprob_sum(x, target, smoothing, tile_n=16)  # grid (2, 2)
    jax.block_until_ready((s_auto, s_tiled))
    assert jnp.allclose(s_auto / (N * C), ref_s / (N * C), rtol=1e-4, atol=1e-4)
    assert jnp.allclose(s_tiled / (N * C), ref_s / (N * C), rtol=1e-4, atol=1e-4)

    # Ragged batch (N not a multiple of tile_n): exercises the masked tail block.
    N2, C2 = 50, 96
    x2 = jax.random.normal(jax.random.PRNGKey(1), (N2, C2), dtype=jnp.float32)
    t2 = jax.random.randint(jax.random.PRNGKey(2), (N2,), 0, C2, dtype=jnp.int32)
    _, ref_s2 = _reference(x2, t2, smoothing)
    s2 = _smoothed_logprob_sum(x2, t2, smoothing, tile_n=16)
    jax.block_until_ready(s2)
    assert jnp.allclose(s2 / (N2 * C2), ref_s2 / (N2 * C2), rtol=1e-4, atol=1e-4)

    # bf16 logits stream at half the HBM bytes; math stays in f32 in-kernel.
    xb = x.astype(jnp.bfloat16)
    _, ref_sb = _reference(xb, target, smoothing)
    sb = _smoothed_logprob_sum(xb, target, smoothing, tile_n=32)
    jax.block_until_ready(sb)
    assert jnp.allclose(sb / (N * C), ref_sb / (N * C), rtol=1e-3, atol=1e-3)

    # Full module loss. NOTE: the original module fills the target distribution
    # with a negative value (smoothing/C - 1), so KLDivLoss yields NaN — this is
    # reproduced exactly, hence the equal_nan comparison.
    loss = label_smoothing_loss(x, target, smoothing)
    jax.block_until_ready(loss)
    assert jnp.allclose(loss, ref_loss, atol=1e-5, equal_nan=True)

    print("KERNEL_OK")
</pallas_src>

<mosaic_0001>
module attributes {stable_mosaic.version = 11 : i64} {
  func.func @_label_smoothing_kernel(%arg0: i32, %arg1: i32, %arg2: memref<64x128xf32, #tpu.memory_space<vmem>>, %arg3: memref<1x1x64xi32, #tpu.memory_space<vmem>>, %arg4: memref<1x1xf32, #tpu.memory_space<vmem>>) attributes {dimension_semantics = [#tpu.dimension_semantics<parallel>, #tpu.dimension_semantics<arbitrary>], iteration_bounds = array<i64: 1, 1>, scalar_prefetch = 0 : i64, scratch_operands = 0 : i64, tpu.core_type = #tpu.core_type<tc>, window_params = [{transform_indices = @transform_0, window_bounds = array<i64: 64, 128>}, {transform_indices = @transform_1, window_bounds = array<i64: 1, 1, 64>}, {transform_indices = @transform_2, window_bounds = array<i64: 1, 1>}]} {
    %c0_i32 = arith.constant 0 : i32
    %0 = arith.cmpi eq, %arg1, %c0_i32 : i32
    %1 = arith.extui %0 : i1 to i32
    %c0_i32_0 = arith.constant 0 : i32
    %2 = arith.cmpi ne, %1, %c0_i32_0 : i32
    scf.if %2 {
      %cst_17 = arith.constant 0.000000e+00 : f32
      %42 = vector.broadcast %cst_17 : f32 to vector<1x1xf32>
      %c0_18 = arith.constant 0 : index
      %c0_19 = arith.constant 0 : index
      %43 = vector.load %arg4[%c0_18, %c0_19] : memref<1x1xf32, #tpu.memory_space<vmem>>, vector<1x1xf32>
      tpu.vector_store %arg4[%c0_18, %c0_19], %42 {strides = array<i32>} : memref<1x1xf32, #tpu.memory_space<vmem>>, vector<1x1xf32>,
    } else {
    }
    %c0 = arith.constant 0 : index
    %c0_1 = arith.constant 0 : index
    %3 = vector.load %arg2[%c0, %c0_1] : memref<64x128xf32, #tpu.memory_space<vmem>>, vector<64x128xf32>
    %c0_2 = arith.constant 0 : index
    %c0_3 = arith.constant 0 : index
    %c0_4 = arith.constant 0 : index
    %4 = vector.load %arg3[%c0_2, %c0_3, %c0_4] : memref<1x1x64xi32, #tpu.memory_space<vmem>>, vector<1x1x64xi32>
    %5 = vector.shape_cast %4 : vector<1x1x64xi32> to vector<1x64xi32>
    %6 = tpu.transpose %5, [1, 0] : vector<1x64xi32> -> vector<64x1xi32>
    %cst = arith.constant dense<0xFF800000> : vector<64xf32>
    %7 = vector.multi_reduction <maximumf>, %3, %cst [1] : vector<64x128xf32> to vector<64xf32>
    %8 = vector.shape_cast %7 : vector<64xf32> to vector<64x1xf32>
    %9 = vector.broadcast %8 : vector<64x1xf32> to vector<64x128xf32>
    %10 = arith.subf %3, %9 : vector<64x128xf32>
    %11 = math.exp %10 : vector<64x128xf32>
    %cst_5 = arith.constant dense<0.000000e+00> : vector<64xf32>
    %12 = vector.multi_reduction <add>, %11, %cst_5 [1] : vector<64x128xf32> to vector<64xf32>
    %13 = vector.shape_cast %12 : vector<64xf32> to vector<64x1xf32>
    %14 = math.log %13 : vector<64x1xf32>
    %15 = tpu.iota {dimensions = array<i32: 1>} : vector<64x128xi32>
    %16 = vector.broadcast %6 : vector<64x1xi32> to vector<64x128xi32>
    %17 = arith.cmpi eq, %15, %16 : vector<64x128xi32>
    %cst_6 = arith.constant 0.899999976 : f32
    %cst_7 = arith.constant -0.999218761 : f32
    %18 = vector.broadcast %cst_6 : f32 to vector<64x128xf32>
    %19 = vector.broadcast %cst_7 : f32 to vector<64x128xf32>
    %20 = arith.select %17, %18, %19 : vector<64x128xi1>, vector<64x128xf32>
    %21 = arith.mulf %20, %10 : vector<64x128xf32>
    %cst_8 = arith.constant dense<0.000000e+00> : vector<64xf32>
    %22 = vector.multi_reduction <add>, %21, %cst_8 [1] : vector<64x128xf32> to vector<64xf32>
    %23 = vector.shape_cast %22 : vector<64xf32> to vector<64x1xf32>
    %cst_9 = arith.constant -126.000778 : f32
    %24 = vector.broadcast %cst_9 : f32 to vector<64x1xf32>
    %25 = arith.mulf %24, %14 : vector<64x1xf32>
    %26 = arith.subf %23, %25 : vector<64x1xf32>
    %c1_i32 = arith.constant 1 : i32
    %27 = arith.muli %arg0, %c1_i32 : i32
    %28 = arith.addi %27, %arg1 : i32
    %c64_i32 = arith.constant 64 : i32
    %29 = arith.muli %28, %c64_i32 : i32
    %30 = tpu.iota {dimensions = array<i32: 0>} : vector<64x1xi32>
    %31 = vector.broadcast %29 : i32 to vector<64x1xi32>
    %32 = arith.addi %31, %30 : vector<64x1xi32>
    %c64_i32_10 = arith.constant 64 : i32
    %33 = vector.broadcast %c64_i32_10 : i32 to vector<64x1xi32>
    %34 = arith.cmpi slt, %32, %33 : vector<64x1xi32>
    %cst_11 = arith.constant 0.000000e+00 : f32
    %35 = vector.broadcast %cst_11 : f32 to vector<64x1xf32>
    %36 = arith.select %34, %26, %35 : vector<64x1xi1>, vector<64x1xf32>
    %c0_12 = arith.constant 0 : index
    %c0_13 = arith.constant 0 : index
    %37 = vector.load %arg4[%c0_12, %c0_13] : memref<1x1xf32, #tpu.memory_space<vmem>>, vector<1x1xf32>
    %cst_14 = arith.constant dense<0.000000e+00> : vector<1xf32>
    %38 = vector.multi_reduction <add>, %36, %cst_14 [0] : vector<64x1xf32> to vector<1xf32>
    %39 = vector.shape_cast %38 : vector<1xf32> to vector<1x1xf32>
    %40 = arith.addf %37, %39 : vector<1x1xf32>
    %c0_15 = arith.constant 0 : index
    %c0_16 = arith.constant 0 : index
    %41 = vector.load %arg4[%c0_15, %c0_16] : memref<1x1xf32, #tpu.memory_space<vmem>>, vector<1x1xf32>
    tpu.vector_store %arg4[%c0_15, %c0_16], %40 {strides = array<i32>} : memref<1x1xf32, #tpu.memory_space<vmem>>, vector<1x1xf32>,
    return
  }
  func.func @transform_0(%arg0: i32, %arg1: i32) -> (i32, i32) {
    %c1_i32 = arith.constant 1 : i32
    %0 = arith.muli %arg0, %c1_i32 : i32
    %1 = arith.addi %0, %arg1 : i32
    %c0_i32 = arith.constant 0 : i32
    %c0_i32_0 = arith.constant 0 : i32
    return %1, %c0_i32 : i32, i32
  }
  func.func @transform_1(%arg0: i32, %arg1: i32) -> (i32, i32, i32) {
    %c1_i32 = arith.constant 1 : i32
    %0 = arith.muli %arg0, %c1_i32 : i32
    %1 = arith.addi %0, %arg1 : i32
    %c0_i32 = arith.constant 0 : i32
    %c0_i32_0 = arith.constant 0 : i32
    %c0_i32_1 = arith.constant 0 : i32
    return %1, %c0_i32, %c0_i32_0 : i32, i32, i32
  }
  func.func @transform_2(%arg0: i32, %arg1: i32) -> (i32, i32) {
    %c0_i32 = arith.constant 0 : i32
    %c0_i32_0 = arith.constant 0 : i32
    return %arg0, %c0_i32 : i32, i32
  }
}

</mosaic_0001>

<llo_original>
// kernel: tpu_custom_call.1
$region0: #{tpu_custom_call.1}
  #allocation0 [shape = 'u32[]', space=smem, size = 0x4, offset = 0x4, fixed_abs, tag = 'smem constant byte address 0x4 - core index']
  #allocation1 [shape = 'u32[72,128]{1,0:T(1,128)}', space=vmem, size = 0x9000, scoped, tag = 'internal scratch']
  %s0 = inlined_call_operand.hbm [shape: f32[64,128], index: 0, kind: input, shape index: {}]
  %s1 = inlined_call_operand.hbm [shape: s32[1,1,64], index: 1, kind: input, shape index: {}]
  %s2 = inlined_call_operand.hbm [shape: f32[1,1], index: 2, kind: output, shape index: {}]
  %s3 = sld [smem:[#allocation0]]
  $region30: #{tpu_custom_call.1} parent=0
    _
  %s5 = ssub.s32 1, %s3
  %s6 = scalar_select 0, %s5, %s3
  $region1: #{tpu_custom_call.1} parent=0
    #allocation2 [shape = 'u8[32768]{0}', space=vmem, size = 0x8000, scoped, tag = 'input window, operand 0, single buffered']
    #allocation3 [shape = 's32[1]{0}', space=sflag, size = 0x4, scoped, tag = 'scoped memory for tpu_custom_call.1']
    #allocation4 [shape = 's32[1]{0}', space=sflag, size = 0x4, scoped, tag = 'scoped memory for tpu_custom_call.1']
    #allocation5 [shape = 'u8[512]{0}', space=vmem, size = 0x400, scoped, tag = 'input window, operand 1, single buffered']
    #allocation6 [shape = 's32[1]{0}', space=sflag, size = 0x4, scoped, tag = 'scoped memory for tpu_custom_call.1']
    #allocation7 [shape = 'u8[512]{0}', space=vmem, size = 0x400, scoped, tag = 'output window, operand 0, single buffered']
    %7 = vsyncpa [#allocation3], 0
    %8 = vsyncpa [#allocation6], 0
    %9 = vsyncpa [#allocation4], 0
    // Predicated region
    $region2: #{tpu_custom_call.1} parent=1 // pred_check
      _
    $region3: #{tpu_custom_call.1} parent=1 // pred_check_branch
      %11 = sbr.rel (0) target = $region5
    $region4: #{tpu_custom_call.1} parent=1 // pred_region
      %s12 = sadd.s32 0, 0
      %s13 = smul.u32 8, %s12
      %15 = vsyncadd [#allocation3], 0
      %s16 = smul.addr %s13, 8
      %s17 = scalar_lea.hbm %s0, %s16
      %s18 = sshll.u32 %s17, 4
      %s19 = int_to_ptr.hbm [resolvable:$true] %s18
      %s20 = sshll.u32 [#allocation2], 4
      %s21 = int_to_ptr.vmem [resolvable:$true] %s20
      %26 = dma.hbm_to_vmem [thread:$0]  %s19, 1024, %s21, [#allocation3], 128, 128, 8
    $region5: #{tpu_custom_call.1} parent=1 // pred_fallthru
      _
    // Predicated region
    $region6: #{tpu_custom_call.1} parent=1 // pred_check
      _
    $region7: #{tpu_custom_call.1} parent=1 // pred_check_branch
      %28 = sbr.rel (0) target = $region9
    $region8: #{tpu_custom_call.1} parent=1 // pred_region
      %s29 = sadd.s32 0, 0
      %31 = vsyncadd [#allocation6], 0
      %s32 = scalar_lea.hbm %s1, %s29
      %s34 = sshll.u32 %s32, 4
      %s35 = int_to_ptr.hbm [resolvable:$true] %s34
      %s36 = sshll.u32 [#allocation5], 4
      %s37 = int_to_ptr.vmem [resolvable:$true] %s36
      %39 = dma.hbm_to_vmem [thread:$0]  %s35, 16, %s37, [#allocation6]
    $region9: #{tpu_custom_call.1} parent=1 // pred_fallthru
      _
    // Predicated region
    $region10: #{tpu_custom_call.1} parent=1 // pred_check
      _
    $region11: #{tpu_custom_call.1} parent=1 // pred_check_branch
      %41 = sbr.rel (0) target = $region13
    $region12: #{tpu_custom_call.1} parent=1 // pred_region
      %43 = dma.done [#allocation3], 1024
    $region13: #{tpu_custom_call.1} parent=1 // pred_fallthru
      _
    // Predicated region
    $region14: #{tpu_custom_call.1} parent=1 // pred_check
      _
    $region15: #{tpu_custom_call.1} parent=1 // pred_check_branch
      %45 = sbr.rel (0) target = $region17
    $region16: #{tpu_custom_call.1} parent=1 // pred_region
      %47 = dma.done [#allocation6], 16
    $region17: #{tpu_custom_call.1} parent=1 // pred_fallthru
      _
    %s48 = sadd.s32 0, 0
    %s49 = smul.u32 8, %s48
    %s50 = sadd.s32 0, 0
    %p51 = scmp.eq.s32.totalorder 0, 0
    // Predicated region
    $region18: #{tpu_custom_call.1} parent=1 // pred_check
      %p52 = pneg %p51
    $region19: #{tpu_custom_call.1} parent=1 // pred_check_branch
      %54 = sbr.rel (%p52) target = $region21
    $region20: #{tpu_custom_call.1} parent=1 // pred_region
      %vm55 = vcmask 0
      %56 = vst.msk [vmem:[#allocation7] sm:$0x1] %vm55, 0.0
    $region21: #{tpu_custom_call.1} parent=1 // pred_fallthru
      _
    %v57 = vld [vmem:[#allocation2] sm:$0xff]
    %v58 = vld [vmem:[#allocation2 + $0x8] sm:$0xff]
    %v59 = vld [vmem:[#allocation2 + $0x10] sm:$0xff]
    %v60 = vld [vmem:[#allocation2 + $0x18] sm:$0xff]
    %v61 = vld [vmem:[#allocation2 + $0x20] sm:$0xff]
    %v62 = vld [vmem:[#allocation2 + $0x28] sm:$0xff]
    %v63 = vld [vmem:[#allocation2 + $0x30] sm:$0xff]
    %v64 = vld [vmem:[#allocation2 + $0x38] sm:$0xff]
    %v65 = vld [vmem:[#allocation5] sm:$0x1]
    %66 = vxpose.xlu0.b32.start [1/16] %v65, 128
    %67 = vxpose.xlu0.b32.cont [2/16] 0, 128
    %68 = vxpose.xlu0.b32.cont [3/16] 0, 128
    %69 = vxpose.xlu0.b32.cont [4/16] 0, 128
    %70 = vxpose.xlu0.b32.cont [5/16] 0, 128
    %71 = vxpose.xlu0.b32.cont [6/16] 0, 128
    %72 = vxpose.xlu0.b32.cont [7/16] 0, 128
    %73 = vxpose.xlu0.b32.cont [8/16] 0, 128
    %74 = vxpose.xlu0.b32.cont [9/16] 0, 128
    %75 = vxpose.xlu0.b32.cont [10/16] 0, 128
    %76 = vxpose.xlu0.b32.cont [11/16] 0, 128
    %77 = vxpose.xlu0.b32.cont [12/16] 0, 128
    %78 = vxpose.xlu0.b32.cont [13/16] 0, 128
    %79 = vxpose.xlu0.b32.cont [14/16] 0, 128
    %80 = vxpose.xlu0.b32.cont [15/16] 0, 128
    %81 = vxpose.xlu0.b32.end [16/16] 0, 128
    %v82 = vpop.trf.xlu0
    %v83 = vpop.trf.xlu0
    %v84 = vpop.trf.xlu0
    %v85 = vpop.trf.xlu0
    %v86 = vpop.trf.xlu0
    %v87 = vpop.trf.xlu0
    %v88 = vpop.trf.xlu0
    %v89 = vpop.trf.xlu0
    %v90 = vpop.trf.xlu0
    %v91 = vpop.trf.xlu0
    %v92 = vpop.trf.xlu0
    %v93 = vpop.trf.xlu0
    %v94 = vpop.trf.xlu0
    %v95 = vpop.trf.xlu0
    %v96 = vpop.trf.xlu0
    %v97 = vpop.trf.xlu0
    %98 = vmax.xlane.f32.xlu0 %v57
    %v99 = vpop.xlane.xlu0 %98
    %100 = vmax.xlane.f32.xlu0 %v58
    %v101 = vpop.xlane.xlu0 %100
    %102 = vmax.xlane.f32.xlu0 %v59
    %v103 = vpop.xlane.xlu0 %102
    %104 = vmax.xlane.f32.xlu0 %v60
    %v105 = vpop.xlane.xlu0 %104
    %106 = vmax.xlane.f32.xlu0 %v61
    %v107 = vpop.xlane.xlu0 %106
    %108 = vmax.xlane.f32.xlu0 %v62
    %v109 = vpop.xlane.xlu0 %108
    %110 = vmax.xlane.f32.xlu0 %v63
    %v111 = vpop.xlane.xlu0 %110
    %112 = vmax.xlane.f32.xlu0 %v64
    %v113 = vpop.xlane.xlu0 %112
    %v114 = vsub.f32 %v57, %v99
    %v115 = vsub.f32 %v58, %v101
    %v116 = vsub.f32 %v59, %v103
    %v117 = vsub.f32 %v60, %v105
    %v118 = vsub.f32 %v61, %v107
    %v119 = vsub.f32 %v62, %v109
    %v120 = vsub.f32 %v63, %v111
    %v121 = vsub.f32 %v64, %v113
    %v122 = vmul.f32 %v114, 1.442695
    %v123 = vpow.pop %v122
    %v124 = vmul.f32 %v115, 1.442695
    %v125 = vpow.pop %v124
    %v126 = vmul.f32 %v116, 1.442695
    %v127 = vpow.pop %v126
    %v128 = vmul.f32 %v117, 1.442695
    %v129 = vpow.pop %v128
    %v130 = vmul.f32 %v118, 1.442695
    %v131 = vpow.pop %v130
    %v132 = vmul.f32 %v119, 1.442695
    %v133 = vpow.pop %v132
    %v134 = vmul.f32 %v120, 1.442695
    %v135 = vpow.pop %v134
    %v136 = vmul.f32 %v121, 1.442695
    %v137 = vpow.pop %v136
    %138 = vadd.xlane.f32.xlu0 %v123
    %v139 = vpop.xlane.xlu0 %138
    %140 = vadd.xlane.f32.xlu0 %v125
    %v141 = vpop.xlane.xlu0 %140
    %142 = vadd.xlane.f32.xlu0 %v127
    %v143 = vpop.xlane.xlu0 %142
    %144 = vadd.xlane.f32.xlu0 %v129
    %v145 = vpop.xlane.xlu0 %144
    %146 = vadd.xlane.f32.xlu0 %v131
    %v147 = vpop.xlane.xlu0 %146
    %148 = vadd.xlane.f32.xlu0 %v133
    %v149 = vpop.xlane.xlu0 %148
    %150 = vadd.xlane.f32.xlu0 %v135
    %v151 = vpop.xlane.xlu0 %150
    %152 = vadd.xlane.f32.xlu0 %v137
    %v153 = vpop.xlane.xlu0 %152
    %v154 = vlog2.pop %v139
    %v155 = vmul.f32 %v154, 0.6931472
    %v156 = vlog2.pop %v141
    %v157 = vmul.f32 %v156, 0.6931472
    %v158 = vlog2.pop %v143
    %v159 = vmul.f32 %v158, 0.6931472
    %v160 = vlog2.pop %v145
    %v161 = vmul.f32 %v160, 0.6931472
    %v162 = vlog2.pop %v147
    %v163 = vmul.f32 %v162, 0.6931472
    %v164 = vlog2.pop %v149
    %v165 = vmul.f32 %v164, 0.6931472
    %v166 = vlog2.pop %v151
    %v167 = vmul.f32 %v166, 0.6931472
    %v168 = vlog2.pop %v153
    %v169 = vmul.f32 %v168, 0.6931472
    %v170 = vlaneseq
    %v171 = vand.u32 %v170, 127
    %172 = vset.pattern.permute.xlu0 0
    %173 = vperm.xlu0 %172, %v82
    %v174 = vpop.permute.xlu0 %173
    %175 = vset.pattern.permute.xlu0 0
    %176 = vperm.xlu0 %175, %v83
    %v177 = vpop.permute.xlu0 %176
    %178 = vset.pattern.permute.xlu0 0
    %179 = vperm.xlu0 %178, %v84
    %v180 = vpop.permute.xlu0 %179
    %181 = vset.pattern.permute.xlu0 0
    %182 = vperm.xlu0 %181, %v85
    %v183 = vpop.permute.xlu0 %182
    %184 = vset.pattern.permute.xlu0 0
    %185 = vperm.xlu0 %184, %v86
    %v186 = vpop.permute.xlu0 %185
    %187 = vset.pattern.permute.xlu0 0
    %188 = vperm.xlu0 %187, %v87
    %v189 = vpop.permute.xlu0 %188
    %190 = vset.pattern.permute.xlu0 0
    %191 = vperm.xlu0 %190, %v88
    %v192 = vpop.permute.xlu0 %191
    %193 = vset.pattern.permute.xlu0 0
    %194 = vperm.xlu0 %193, %v89
    %v195 = vpop.permute.xlu0 %194
    %vm196 = vcmp.eq.s32.totalorder %v171, %v174
    %vm197 = vcmp.eq.s32.totalorder %v171, %v177
    %vm198 = vcmp.eq.s32.totalorder %v171, %v180
    %vm199 = vcmp.eq.s32.totalorder %v171, %v183
    %vm200 = vcmp.eq.s32.totalorder %v171, %v186
    %vm201 = vcmp.eq.s32.totalorder %v171, %v189
    %vm202 = vcmp.eq.s32.totalorder %v171, %v192
    %vm203 = vcmp.eq.s32.totalorder %v171, %v195
    %v204 = vsel %vm196, 0.9, -0.99921876
    %v205 = vsel %vm197, 0.9, -0.99921876
    %v206 = vsel %vm198, 0.9, -0.99921876
    %v207 = vsel %vm199, 0.9, -0.99921876
    %v208 = vsel %vm200, 0.9, -0.99921876
    %v209 = vsel %vm201, 0.9, -0.99921876
    %v210 = vsel %vm202, 0.9, -0.99921876
    %v211 = vsel %vm203, 0.9, -0.99921876
    %v212 = vmul.f32 %v204, %v114
    %v213 = vmul.f32 %v205, %v115
    %v214 = vmul.f32 %v206, %v116
    %v215 = vmul.f32 %v207, %v117
    %v216 = vmul.f32 %v208, %v118
    %v217 = vmul.f32 %v209, %v119
    %v218 = vmul.f32 %v210, %v120
    %v219 = vmul.f32 %v211, %v121
    %220 = vadd.xlane.f32.xlu0 %v212
    %v221 = vpop.xlane.xlu0 %220
    %222 = vadd.xlane.f32.xlu0 %v213
    %v223 = vpop.xlane.xlu0 %222
    %224 = vadd.xlane.f32.xlu0 %v214
    %v225 = vpop.xlane.xlu0 %224
    %226 = vadd.xlane.f32.xlu0 %v215
    %v227 = vpop.xlane.xlu0 %226
    %228 = vadd.xlane.f32.xlu0 %v216
    %v229 = vpop.xlane.xlu0 %228
    %230 = vadd.xlane.f32.xlu0 %v217
    %v231 = vpop.xlane.xlu0 %230
    %232 = vadd.xlane.f32.xlu0 %v218
    %v233 = vpop.xlane.xlu0 %232
    %234 = vadd.xlane.f32.xlu0 %v219
    %v235 = vpop.xlane.xlu0 %234
    %v236 = vmul.f32 %v155, -126.00078
    %v237 = vmul.f32 %v157, -126.00078
    %v238 = vmul.f32 %v159, -126.00078
    %v239 = vmul.f32 %v161, -126.00078
    %v240 = vmul.f32 %v163, -126.00078
    %v241 = vmul.f32 %v165, -126.00078
    %v242 = vmul.f32 %v167, -126.00078
    %v243 = vmul.f32 %v169, -126.00078
    %v244 = vsub.f32 %v221, %v236
    %v245 = vsub.f32 %v223, %v237
    %v246 = vsub.f32 %v225, %v238
    %v247 = vsub.f32 %v227, %v239
    %v248 = vsub.f32 %v229, %v240
    %v249 = vsub.f32 %v231, %v241
    %v250 = vsub.f32 %v233, %v242
    %v251 = vsub.f32 %v235, %v243
    %s252 = sadd.s32 0, 0
    %s253 = smul.u32 %s252, 64
    %v254 = vlaneseq
    %v255 = vshrl.u32 %v254, 7
    %v256 = vadd.s32 %v255, 8
    %v257 = vadd.s32 %v255, 16
    %v258 = vadd.s32 %v255, 24
    %v259 = vadd.s32 %v255, 32
    %v260 = vadd.s32 %v255, 40
    %v261 = vadd.s32 %v255, 48
    %v262 = vadd.s32 %v255, 56
    %v263 = vstv %s253
    %v264 = vadd.s32 %v263, %v255
    %v265 = vadd.s32 %v263, %v256
    %v266 = vadd.s32 %v263, %v257
    %v267 = vadd.s32 %v263, %v258
    %v268 = vadd.s32 %v263, %v259
    %v269 = vadd.s32 %v263, %v260
    %v270 = vadd.s32 %v263, %v261
    %v271 = vadd.s32 %v263, %v262
    %vm272 = vcmp.lt.s32.totalorder %v264, 64
    %vm273 = vcmp.lt.s32.totalorder %v265, 64
    %vm274 = vcmp.lt.s32.totalorder %v266, 64
    %vm275 = vcmp.lt.s32.totalorder %v267, 64
    %vm276 = vcmp.lt.s32.totalorder %v268, 64
    %vm277 = vcmp.lt.s32.totalorder %v269, 64
    %vm278 = vcmp.lt.s32.totalorder %v270, 64
    %vm279 = vcmp.lt.s32.totalorder %v271, 64
    %v280 = vsel %vm272, %v244, 0.0
    %v281 = vsel %vm273, %v245, 0.0
    %v282 = vsel %vm274, %v246, 0.0
    %v283 = vsel %vm275, %v247, 0.0
    %v284 = vsel %vm276, %v248, 0.0
    %v285 = vsel %vm277, %v249, 0.0
    %v286 = vsel %vm278, %v250, 0.0
    %v287 = vsel %vm279, %v251, 0.0
    %v288 = vld [vmem:[#allocation7] sm:$0x1]
    %v289 = vadd.f32 %v280, %v281
    %v290 = vadd.f32 %v289, %v282
    %v291 = vadd.f32 %v290, %v283
    %v292 = vadd.f32 %v291, %v284
    %v293 = vadd.f32 %v292, %v285
    %v294 = vadd.f32 %v293, %v286
    %v295 = vadd.f32 %v294, %v287
    %v296 = vrot.slane %v295, 4
    %v297 = vadd.f32 %v295, %v296
    %v298 = vrot.slane %v297, 2
    %v299 = vadd.f32 %v297, %v298
    %v300 = vrot.slane %v299, 1
    %v301 = vadd.f32 %v299, %v300
    %v302 = vadd.f32 %v288, %v301
    %vm303 = vcmask 0
    %304 = vst.msk [vmem:[#allocation7] sm:$0x1] %vm303, %v302
    // Predicated region
    $region22: #{tpu_custom_call.1} parent=1 // pred_check
      _
    $region23: #{tpu_custom_call.1} parent=1 // pred_check_branch
      %306 = sbr.rel (0) target = $region25
    $region24: #{tpu_custom_call.1} parent=1 // pred_region
      %308 = vsyncadd [#allocation4], 0
      %s310 = sshll.u32 [#allocation7], 4
      %s311 = int_to_ptr.vmem [resolvable:$true] %s310
      %s312 = sshll.u32 %s2, 4
      %s313 = int_to_ptr.hbm [resolvable:$true] %s312
      %315 = dma.vmem_to_hbm [thread:$0]  %s311, 16, %s313, [#allocation4]
    $region25: #{tpu_custom_call.1} parent=1 // pred_fallthru
      _
    // Predicated region
    $region26: #{tpu_custom_call.1} parent=1 // pred_check
      _
    $region27: #{tpu_custom_call.1} parent=1 // pred_check_branch
      %317 = sbr.rel (0) target = $region29
    $region28: #{tpu_custom_call.1} parent=1 // pred_region
      %319 = dma.done [#allocation4], 16
    $region29: #{tpu_custom_call.1} parent=1 // pred_fallthru
      _
    %320 = vsyncpa [#allocation3], 1
    %321 = vsyncpa [#allocation6], 1
    %322 = vsyncpa [#allocation4], 1

</llo_original>
